<compile_context>
chip_gen: v5e
topology: v5e:2x2
jax: 0.10.0
libtpu: 0.0.40
codegen_flags: <defaults>
</compile_context>

<pallas_src>
import jax
import jax.numpy as jnp
import numpy as np
from jax.experimental import pallas as pl
from jax.experimental.pallas import tpu as pltpu

BN_EPS = 1e-5


# ----------------------------------------------------------------------------
# Fused Pallas kernel: whole BasicBlock for one image per grid step
# ----------------------------------------------------------------------------
def _basic_block_kernel(x_ref, a1_ref, b1_ref, a2_ref, b2_ref, o_ref,
                        xp_ref, y1p_ref):
    """x_ref:  (1, H, W*C)    image rows, W and C folded into the lane dim
       a*_ref: (3, W*C, W*C)  banded 3x3 conv weights (BN scale folded in)
       b*_ref: (1, W*C)       folded BN bias (tiled over W)
       o_ref:  (1, H, W*C)    output
       xp_ref, y1p_ref: (H+2, W*C) f32 VMEM scratch (vertical zero padding)."""
    f32 = jnp.float32
    h = xp_ref.shape[0] - 2
    x = x_ref[0].astype(f32)                                   # (H, W*C)

    # ---- conv1 + bn1 (scale folded into a1) + relu --------------------------
    xp_ref[...] = jnp.zeros_like(xp_ref)                       # zero top/bottom pad
    xp_ref[pl.ds(1, h), :] = x
    z1 = (jnp.dot(xp_ref[pl.ds(0, h), :], a1_ref[0], preferred_element_type=f32)
          + jnp.dot(x,                     a1_ref[1], preferred_element_type=f32)
          + jnp.dot(xp_ref[pl.ds(2, h), :], a1_ref[2], preferred_element_type=f32))
    y1 = jnp.maximum(z1 + b1_ref[...], 0.0)

    # ---- conv2 + bn2 + residual + relu  (y1 never leaves VMEM) --------------
    y1p_ref[...] = jnp.zeros_like(y1p_ref)
    y1p_ref[pl.ds(1, h), :] = y1
    z2 = (jnp.dot(y1p_ref[pl.ds(0, h), :], a2_ref[0], preferred_element_type=f32)
          + jnp.dot(y1,                     a2_ref[1], preferred_element_type=f32)
          + jnp.dot(y1p_ref[pl.ds(2, h), :], a2_ref[2], preferred_element_type=f32))
    o_ref[0] = jnp.maximum(z2 + b2_ref[...] + x, 0.0).astype(o_ref.dtype)


# ----------------------------------------------------------------------------
# Constant weight / BN preparation (one-time transforms, plain JAX)
# ----------------------------------------------------------------------------
def _fold_bn(gamma, beta, mean, var):
    scale = gamma / jnp.sqrt(var + BN_EPS)
    bias = beta - mean * scale
    return scale, bias


def _banded_conv_weights(w_oihw, bn_scale, w_dim):
    """(Cout, Cin, 3, 3) -> (3, W*Cin, W*Cout) banded matrices.

    A[kh][win*Cin + ci, wout*Cout + co] = w[co, ci, kh, kw] * bn_scale[co]
      where win = wout + kw - 1 in [0, W)  (horizontal zero-pad baked in)."""
    mats = []
    for kh in range(3):
        a = 0.0
        for kw in range(3):
            shift = jnp.eye(w_dim, k=1 - kw, dtype=jnp.float32)       # (W, W)
            blk = (w_oihw[:, :, kh, kw] * bn_scale[:, None]).T        # (Cin, Cout)
            a = a + jnp.kron(shift, blk)
        mats.append(a)
    return jnp.stack(mats)                                            # (3, W*Cin, W*Cout)


# ----------------------------------------------------------------------------
# Wrapper
# ----------------------------------------------------------------------------
def basic_block_forward(x_nchw, params):
    """BasicBlock forward (stride=1, downsample=None).  x: (N, C, H, W) f32."""
    n, c, h, w = x_nchw.shape
    wc = w * c

    s1, b1 = _fold_bn(params["bn1_g"], params["bn1_b"],
                      params["bn1_m"], params["bn1_v"])
    s2, b2 = _fold_bn(params["bn2_g"], params["bn2_b"],
                      params["bn2_m"], params["bn2_v"])
    a1 = _banded_conv_weights(params["conv1_w"], s1, w)
    a2 = _banded_conv_weights(params["conv2_w"], s2, w)
    b1f = jnp.tile(b1, w)[None, :]                  # (1, W*C)
    b2f = jnp.tile(b2, w)[None, :]

    # NCHW -> (N, H, W*C): fold W and C into the lane dimension (lane-dense).
    x_rows = jnp.transpose(x_nchw, (0, 2, 3, 1)).reshape(n, h, wc)

    out_rows = pl.pallas_call(
        _basic_block_kernel,
        out_shape=jax.ShapeDtypeStruct((n, h, wc), jnp.float32),
        grid_spec=pltpu.PrefetchScalarGridSpec(
            num_scalar_prefetch=0,
            grid=(n,),
            in_specs=[
                pl.BlockSpec((1, h, wc), lambda i: (i, 0, 0)),    # x, one image
                pl.BlockSpec((3, wc, wc), lambda i: (0, 0, 0)),   # A1 (resident)
                pl.BlockSpec((1, wc), lambda i: (0, 0)),          # bias1
                pl.BlockSpec((3, wc, wc), lambda i: (0, 0, 0)),   # A2 (resident)
                pl.BlockSpec((1, wc), lambda i: (0, 0)),          # bias2
            ],
            out_specs=pl.BlockSpec((1, h, wc), lambda i: (i, 0, 0)),
            scratch_shapes=[pltpu.VMEM((h + 2, wc), jnp.float32),   # padded x
                            pltpu.VMEM((h + 2, wc), jnp.float32)],  # padded y1
        ),
        compiler_params=pltpu.CompilerParams(
            dimension_semantics=("parallel",)),
    )(x_rows, a1, b1f, a2, b2f)

    return jnp.transpose(out_rows.reshape(n, h, w, c), (0, 3, 1, 2))  # -> NCHW


# ----------------------------------------------------------------------------
# Pure-JAX reference (mirrors the PyTorch forward, eval-mode BN)
# ----------------------------------------------------------------------------
def _reference(x, p):
    def conv(x, w):
        return jax.lax.conv_general_dilated(
            x, w, (1, 1), ((1, 1), (1, 1)),
            dimension_numbers=("NCHW", "OIHW", "NCHW"))

    def bn(x, g, b, m, v):
        g, b, m, v = (a[None, :, None, None] for a in (g, b, m, v))
        return (x - m) / jnp.sqrt(v + BN_EPS) * g + b

    out = jax.nn.relu(bn(conv(x, p["conv1_w"]),
                         p["bn1_g"], p["bn1_b"], p["bn1_m"], p["bn1_v"]))
    out = bn(conv(out, p["conv2_w"]),
             p["bn2_g"], p["bn2_b"], p["bn2_m"], p["bn2_v"])
    return jax.nn.relu(out + x)


# ----------------------------------------------------------------------------
if __name__ == "__main__":
    N, C, H, W = 2, 8, 16, 16   # inplanes == planes, stride=1, no downsample
    key = jax.random.PRNGKey(0)
    ks = jax.random.split(key, 9)
    params = {
        "conv1_w": 0.1 * jax.random.normal(ks[0], (C, C, 3, 3), jnp.float32),
        "conv2_w": 0.1 * jax.random.normal(ks[1], (C, C, 3, 3), jnp.float32),
        "bn1_g": 1.0 + 0.1 * jax.random.normal(ks[2], (C,), jnp.float32),
        "bn1_b": 0.1 * jax.random.normal(ks[3], (C,), jnp.float32),
        "bn1_m": 0.05 * jax.random.normal(ks[4], (C,), jnp.float32),
        "bn1_v": jnp.abs(1.0 + 0.1 * jax.random.normal(ks[5], (C,), jnp.float32)),
        "bn2_g": 1.0 + 0.1 * jax.random.normal(ks[6], (C,), jnp.float32),
        "bn2_b": 0.1 * jax.random.normal(ks[7], (C,), jnp.float32),
        "bn2_m": jnp.zeros((C,), jnp.float32),
        "bn2_v": jnp.ones((C,), jnp.float32),
    }
    x = jax.random.normal(ks[8], (N, C, H, W), jnp.float32)

    out = jax.jit(basic_block_forward)(x, params)
    out = jax.block_until_ready(out)

    ref = _reference(x, params)
    assert out.shape == (N, C, H, W)
    np.testing.assert_allclose(np.asarray(out), np.asarray(ref),
                               rtol=1e-4, atol=1e-4)
    print("KERNEL_OK")
</pallas_src>

<mosaic_0001>
module attributes {stable_mosaic.version = 11 : i64} {
  func.func @_basic_block_kernel(%arg0: i32, %arg1: memref<1x16x128xf32, #tpu.memory_space<vmem>>, %arg2: memref<3x128x128xf32, #tpu.memory_space<vmem>>, %arg3: memref<1x128xf32, #tpu.memory_space<vmem>>, %arg4: memref<3x128x128xf32, #tpu.memory_space<vmem>>, %arg5: memref<1x128xf32, #tpu.memory_space<vmem>>, %arg6: memref<1x16x128xf32, #tpu.memory_space<vmem>>, %arg7: memref<18x128xf32, #tpu.memory_space<vmem>>, %arg8: memref<18x128xf32, #tpu.memory_space<vmem>>) attributes {dimension_semantics = [#tpu.dimension_semantics<parallel>], iteration_bounds = array<i64: 2>, scalar_prefetch = 0 : i64, scratch_operands = 2 : i64, tpu.core_type = #tpu.core_type<tc>, window_params = [{transform_indices = @transform_0, window_bounds = array<i64: 1, 16, 128>}, {pipeline_mode = #tpu.pipeline_mode<synchronous>, transform_indices = @transform_1, window_bounds = array<i64: 3, 128, 128>}, {pipeline_mode = #tpu.pipeline_mode<synchronous>, transform_indices = @transform_2, window_bounds = array<i64: 1, 128>}, {pipeline_mode = #tpu.pipeline_mode<synchronous>, transform_indices = @transform_3, window_bounds = array<i64: 3, 128, 128>}, {pipeline_mode = #tpu.pipeline_mode<synchronous>, transform_indices = @transform_4, window_bounds = array<i64: 1, 128>}, {transform_indices = @transform_5, window_bounds = array<i64: 1, 16, 128>}]} {
    %c0 = arith.constant 0 : index
    %c0_0 = arith.constant 0 : index
    %c0_1 = arith.constant 0 : index
    %0 = vector.load %arg1[%c0, %c0_0, %c0_1] : memref<1x16x128xf32, #tpu.memory_space<vmem>>, vector<1x16x128xf32>
    %1 = vector.shape_cast %0 : vector<1x16x128xf32> to vector<16x128xf32>
    %cst = arith.constant 0.000000e+00 : f32
    %2 = vector.broadcast %cst : f32 to vector<18x128xf32>
    %c0_2 = arith.constant 0 : index
    %c0_3 = arith.constant 0 : index
    %3 = vector.load %arg7[%c0_2, %c0_3] : memref<18x128xf32, #tpu.memory_space<vmem>>, vector<18x128xf32>
    tpu.vector_store %arg7[%c0_2, %c0_3], %2 {strides = array<i32>} : memref<18x128xf32, #tpu.memory_space<vmem>>, vector<18x128xf32>,
    %c1 = arith.constant 1 : index
    %c0_4 = arith.constant 0 : index
    %4 = vector.load %arg7[%c1, %c0_4] : memref<18x128xf32, #tpu.memory_space<vmem>>, vector<16x128xf32>
    tpu.vector_store %arg7[%c1, %c0_4], %1 {strides = array<i32>} : memref<18x128xf32, #tpu.memory_space<vmem>>, vector<16x128xf32>,
    %c0_5 = arith.constant 0 : index
    %c0_6 = arith.constant 0 : index
    %5 = vector.load %arg7[%c0_5, %c0_6] : memref<18x128xf32, #tpu.memory_space<vmem>>, vector<16x128xf32>
    %c0_7 = arith.constant 0 : index
    %c0_8 = arith.constant 0 : index
    %c0_9 = arith.constant 0 : index
    %6 = vector.load %arg2[%c0_7, %c0_8, %c0_9] : memref<3x128x128xf32, #tpu.memory_space<vmem>>, vector<1x128x128xf32>
    %7 = vector.shape_cast %6 : vector<1x128x128xf32> to vector<128x128xf32>
    %cst_10 = arith.constant dense<0.000000e+00> : vector<16x128xf32>
    %8 = tpu.matmul %5, %7, %cst_10 {dimension_numbers = #tpu.dot_dimension_numbers<[1], [0], [0], [1], [0, 0, 1, 1], [], []>} : vector<16x128xf32>, vector<128x128xf32>, vector<16x128xf32> -> vector<16x128xf32>
    %c1_11 = arith.constant 1 : index
    %c0_12 = arith.constant 0 : index
    %c0_13 = arith.constant 0 : index
    %9 = vector.load %arg2[%c1_11, %c0_12, %c0_13] : memref<3x128x128xf32, #tpu.memory_space<vmem>>, vector<1x128x128xf32>
    %10 = vector.shape_cast %9 : vector<1x128x128xf32> to vector<128x128xf32>
    %cst_14 = arith.constant dense<0.000000e+00> : vector<16x128xf32>
    %11 = tpu.matmul %1, %10, %cst_14 {dimension_numbers = #tpu.dot_dimension_numbers<[1], [0], [0], [1], [0, 0, 1, 1], [], []>} : vector<16x128xf32>, vector<128x128xf32>, vector<16x128xf32> -> vector<16x128xf32>
    %12 = arith.addf %8, %11 : vector<16x128xf32>
    %c2 = arith.constant 2 : index
    %c0_15 = arith.constant 0 : index
    %13 = vector.load %arg7[%c2, %c0_15] : memref<18x128xf32, #tpu.memory_space<vmem>>, vector<16x128xf32>
    %c2_16 = arith.constant 2 : index
    %c0_17 = arith.constant 0 : index
    %c0_18 = arith.constant 0 : index
    %14 = vector.load %arg2[%c2_16, %c0_17, %c0_18] : memref<3x128x128xf32, #tpu.memory_space<vmem>>, vector<1x128x128xf32>
    %15 = vector.shape_cast %14 : vector<1x128x128xf32> to vector<128x128xf32>
    %cst_19 = arith.constant dense<0.000000e+00> : vector<16x128xf32>
    %16 = tpu.matmul %13, %15, %cst_19 {dimension_numbers = #tpu.dot_dimension_numbers<[1], [0], [0], [1], [0, 0, 1, 1], [], []>} : vector<16x128xf32>, vector<128x128xf32>, vector<16x128xf32> -> vector<16x128xf32>
    %17 = arith.addf %12, %16 : vector<16x128xf32>
    %c0_20 = arith.constant 0 : index
    %c0_21 = arith.constant 0 : index
    %18 = vector.load %arg3[%c0_20, %c0_21] : memref<1x128xf32, #tpu.memory_space<vmem>>, vector<1x128xf32>
    %19 = vector.broadcast %18 : vector<1x128xf32> to vector<16x128xf32>
    %20 = arith.addf %17, %19 : vector<16x128xf32>
    %cst_22 = arith.constant 0.000000e+00 : f32
    %21 = vector.broadcast %cst_22 : f32 to vector<16x128xf32>
    %22 = arith.maximumf %20, %21 : vector<16x128xf32>
    %cst_23 = arith.constant 0.000000e+00 : f32
    %23 = vector.broadcast %cst_23 : f32 to vector<18x128xf32>
    %c0_24 = arith.constant 0 : index
    %c0_25 = arith.constant 0 : index
    %24 = vector.load %arg8[%c0_24, %c0_25] : memref<18x128xf32, #tpu.memory_space<vmem>>, vector<18x128xf32>
    tpu.vector_store %arg8[%c0_24, %c0_25], %23 {strides = array<i32>} : memref<18x128xf32, #tpu.memory_space<vmem>>, vector<18x128xf32>,
    %c1_26 = arith.constant 1 : index
    %c0_27 = arith.constant 0 : index
    %25 = vector.load %arg8[%c1_26, %c0_27] : memref<18x128xf32, #tpu.memory_space<vmem>>, vector<16x128xf32>
    tpu.vector_store %arg8[%c1_26, %c0_27], %22 {strides = array<i32>} : memref<18x128xf32, #tpu.memory_space<vmem>>, vector<16x128xf32>,
    %c0_28 = arith.constant 0 : index
    %c0_29 = arith.constant 0 : index
    %26 = vector.load %arg8[%c0_28, %c0_29] : memref<18x128xf32, #tpu.memory_space<vmem>>, vector<16x128xf32>
    %c0_30 = arith.constant 0 : index
    %c0_31 = arith.constant 0 : index
    %c0_32 = arith.constant 0 : index
    %27 = vector.load %arg4[%c0_30, %c0_31, %c0_32] : memref<3x128x128xf32, #tpu.memory_space<vmem>>, vector<1x128x128xf32>
    %28 = vector.shape_cast %27 : vector<1x128x128xf32> to vector<128x128xf32>
    %cst_33 = arith.constant dense<0.000000e+00> : vector<16x128xf32>
    %29 = tpu.matmul %26, %28, %cst_33 {dimension_numbers = #tpu.dot_dimension_numbers<[1], [0], [0], [1], [0, 0, 1, 1], [], []>} : vector<16x128xf32>, vector<128x128xf32>, vector<16x128xf32> -> vector<16x128xf32>
    %c1_34 = arith.constant 1 : index
    %c0_35 = arith.constant 0 : index
    %c0_36 = arith.constant 0 : index
    %30 = vector.load %arg4[%c1_34, %c0_35, %c0_36] : memref<3x128x128xf32, #tpu.memory_space<vmem>>, vector<1x128x128xf32>
    %31 = vector.shape_cast %30 : vector<1x128x128xf32> to vector<128x128xf32>
    %cst_37 = arith.constant dense<0.000000e+00> : vector<16x128xf32>
    %32 = tpu.matmul %22, %31, %cst_37 {dimension_numbers = #tpu.dot_dimension_numbers<[1], [0], [0], [1], [0, 0, 1, 1], [], []>} : vector<16x128xf32>, vector<128x128xf32>, vector<16x128xf32> -> vector<16x128xf32>
    %33 = arith.addf %29, %32 : vector<16x128xf32>
    %c2_38 = arith.constant 2 : index
    %c0_39 = arith.constant 0 : index
    %34 = vector.load %arg8[%c2_38, %c0_39] : memref<18x128xf32, #tpu.memory_space<vmem>>, vector<16x128xf32>
    %c2_40 = arith.constant 2 : index
    %c0_41 = arith.constant 0 : index
    %c0_42 = arith.constant 0 : index
    %35 = vector.load %arg4[%c2_40, %c0_41, %c0_42] : memref<3x128x128xf32, #tpu.memory_space<vmem>>, vector<1x128x128xf32>
    %36 = vector.shape_cast %35 : vector<1x128x128xf32> to vector<128x128xf32>
    %cst_43 = arith.constant dense<0.000000e+00> : vector<16x128xf32>
    %37 = tpu.matmul %34, %36, %cst_43 {dimension_numbers = #tpu.dot_dimension_numbers<[1], [0], [0], [1], [0, 0, 1, 1], [], []>} : vector<16x128xf32>, vector<128x128xf32>, vector<16x128xf32> -> vector<16x128xf32>
    %38 = arith.addf %33, %37 : vector<16x128xf32>
    %c0_44 = arith.constant 0 : index
    %c0_45 = arith.constant 0 : index
    %39 = vector.load %arg5[%c0_44, %c0_45] : memref<1x128xf32, #tpu.memory_space<vmem>>, vector<1x128xf32>
    %40 = vector.broadcast %39 : vector<1x128xf32> to vector<16x128xf32>
    %41 = arith.addf %38, %40 : vector<16x128xf32>
    %42 = arith.addf %41, %1 : vector<16x128xf32>
    %cst_46 = arith.constant 0.000000e+00 : f32
    %43 = vector.broadcast %cst_46 : f32 to vector<16x128xf32>
    %44 = arith.maximumf %42, %43 : vector<16x128xf32>
    %c0_47 = arith.constant 0 : index
    %c0_48 = arith.constant 0 : index
    %c0_49 = arith.constant 0 : index
    %45 = vector.load %arg6[%c0_47, %c0_48, %c0_49] : memref<1x16x128xf32, #tpu.memory_space<vmem>>, vector<1x16x128xf32>
    %46 = vector.shape_cast %45 : vector<1x16x128xf32> to vector<16x128xf32>
    %47 = vector.shape_cast %44 : vector<16x128xf32> to vector<1x16x128xf32>
    tpu.vector_store %arg6[%c0_47, %c0_48, %c0_49], %47 {strides = array<i32>} : memref<1x16x128xf32, #tpu.memory_space<vmem>>, vector<1x16x128xf32>,
    return
  }
  func.func @transform_0(%arg0: i32) -> (i32, i32, i32) {
    %c0_i32 = arith.constant 0 : i32
    %c0_i32_0 = arith.constant 0 : i32
    %c0_i32_1 = arith.constant 0 : i32
    return %arg0, %c0_i32, %c0_i32_0 : i32, i32, i32
  }
  func.func @transform_1(%arg0: i32) -> (i32, i32, i32) {
    %c0_i32 = arith.constant 0 : i32
    %c0_i32_0 = arith.constant 0 : i32
    %c0_i32_1 = arith.constant 0 : i32
    %c0_i32_2 = arith.constant 0 : i32
    return %c0_i32, %c0_i32_0, %c0_i32_1 : i32, i32, i32
  }
  func.func @transform_2(%arg0: i32) -> (i32, i32) {
    %c0_i32 = arith.constant 0 : i32
    %c0_i32_0 = arith.constant 0 : i32
    %c0_i32_1 = arith.constant 0 : i32
    return %c0_i32, %c0_i32_0 : i32, i32
  }
  func.func @transform_3(%arg0: i32) -> (i32, i32, i32) {
    %c0_i32 = arith.constant 0 : i32
    %c0_i32_0 = arith.constant 0 : i32
    %c0_i32_1 = arith.constant 0 : i32
    %c0_i32_2 = arith.constant 0 : i32
    return %c0_i32, %c0_i32_0, %c0_i32_1 : i32, i32, i32
  }
  func.func @transform_4(%arg0: i32) -> (i32, i32) {
    %c0_i32 = arith.constant 0 : i32
    %c0_i32_0 = arith.constant 0 : i32
    %c0_i32_1 = arith.constant 0 : i32
    return %c0_i32, %c0_i32_0 : i32, i32
  }
  func.func @transform_5(%arg0: i32) -> (i32, i32, i32) {
    %c0_i32 = arith.constant 0 : i32
    %c0_i32_0 = arith.constant 0 : i32
    %c0_i32_1 = arith.constant 0 : i32
    return %arg0, %c0_i32, %c0_i32_0 : i32, i32, i32
  }
}

</mosaic_0001>

<llo_original>
// kernel: tile.13
$region0: #{tile.13}
  #allocation0 [shape = 's32[1]{0}', space=sflag, size = 0x4, scoped, tag = 'scoped memory for tile.13']
  %s0 = inlined_call_operand.vmem [shape: f32[8], index: 0, kind: input, shape index: {}]
  %s1 = inlined_call_operand.vmem [shape: f32[16,8], index: 1, kind: output, shape index: {}]
  // Predicated region
  $region2: #{tile.13} parent=0 // pred_check
    _
  $region3: #{tile.13} parent=0 // pred_check_branch
    %3 = sbr.rel (0) target = $region5
  $region4: #{tile.13} parent=0 // pred_region
    _
  $region5: #{tile.13} parent=0 // pred_fallthru
    _
  %v4 = vld [vmem:[%s0] ss:$0 sm:$0xff]
  %5 = vst [vmem:[%s1] sm:$0xff] %v4
  %s6 = scalar_lea.vmem %s1, 8
  %7 = vst [vmem:[%s6] sm:$0xff] %v4

// kernel: tile.14
$region0: #{tile.14}
  %s0 = inlined_call_operand.vmem [shape: f32[16,8], index: 0, kind: input, shape index: {}]
  %s1 = inlined_call_operand.vmem [shape: f32[1,128], index: 1, kind: output, shape index: {}]
  $region1: #{tile.14} parent=0
    #allocation0 [shape = 'u8[4096]{0}', space=vmem, size = 0x1000, scoped, tag = 'scoped mem for output reshape']
    %v2 = vld [vmem:[%s0] sm:$0x1]
    %vm3 = vcmask 64512
    %4 = vst.msk [vmem:[#allocation0] sm:$0x1] %vm3, %v2
    %s5 = scalar_lea.vmem %s0, 15
    %v6 = vld [vmem:[%s5] sm:$0x1]
    %7 = vrot.lane.b32.xlu0 %v6, 120
    %v8 = vpop.permute.xlu0 %7
    %vm9 = vcmask 1048512
    %10 = vst.msk [vmem:[#allocation0] sm:$0x1] %vm9, %v8
    %s11 = scalar_lea.vmem %s0, 14
    %v12 = vld [vmem:[%s11] sm:$0x1]
    %13 = vrot.lane.b32.xlu0 %v12, 112
    %v14 = vpop.permute.xlu0 %13
    %vm15 = vcmask 982912
    %16 = vst.msk [vmem:[#allocation0] sm:$0x1] %vm15, %v14
    %s17 = scalar_lea.vmem %s0, 13
    %v18 = vld [vmem:[%s17] sm:$0x1]
    %19 = vrot.lane.b32.xlu0 %v18, 104
    %v20 = vpop.permute.xlu0 %19
    %vm21 = vcmask 917312
    %22 = vst.msk [vmem:[#allocation0] sm:$0x1] %vm21, %v20
    %s23 = scalar_lea.vmem %s0, 12
    %v24 = vld [vmem:[%s23] sm:$0x1]
    %25 = vrot.lane.b32.xlu0 %v24, 96
    %v26 = vpop.permute.xlu0 %25
    %vm27 = vcmask 851712
    %28 = vst.msk [vmem:[#allocation0] sm:$0x1] %vm27, %v26
    %s29 = scalar_lea.vmem %s0, 11
    %v30 = vld [vmem:[%s29] sm:$0x1]
    %31 = vrot.lane.b32.xlu0 %v30, 88
    %v32 = vpop.permute.xlu0 %31
    %vm33 = vcmask 786112
    %34 = vst.msk [vmem:[#allocation0] sm:$0x1] %vm33, %v32
    %s35 = scalar_lea.vmem %s0, 10
    %v36 = vld [vmem:[%s35] sm:$0x1]
    %37 = vrot.lane.b32.xlu0 %v36, 80
    %v38 = vpop.permute.xlu0 %37
    %vm39 = vcmask 720512
    %40 = vst.msk [vmem:[#allocation0] sm:$0x1] %vm39, %v38
    %s41 = scalar_lea.vmem %s0, 9
    %v42 = vld [vmem:[%s41] sm:$0x1]
    %43 = vrot.lane.b32.xlu0 %v42, 72
    %v44 = vpop.permute.xlu0 %43
    %vm45 = vcmask 654912
    %46 = vst.msk [vmem:[#allocation0] sm:$0x1] %vm45, %v44
    %s47 = scalar_lea.vmem %s0, 8
    %v48 = vld [vmem:[%s47] sm:$0x1]
    %49 = vrot.lane.b32.xlu0 %v48, 64
    %v50 = vpop.permute.xlu0 %49
    %vm51 = vcmask 589312
    %52 = vst.msk [vmem:[#allocation0] sm:$0x1] %vm51, %v50
    %s53 = scalar_lea.vmem %s0, 7
    %v54 = vld [vmem:[%s53] sm:$0x1]
    %55 = vrot.lane.b32.xlu0 %v54, 56
    %v56 = vpop.permute.xlu0 %55
    %vm57 = vcmask 523712
    %58 = vst.msk [vmem:[#allocation0] sm:$0x1] %vm57, %v56
    %s59 = scalar_lea.vmem %s0, 6
    %v60 = vld [vmem:[%s59] sm:$0x1]
    %61 = vrot.lane.b32.xlu0 %v60, 48
    %v62 = vpop.permute.xlu0 %61
    %vm63 = vcmask 458112
    %64 = vst.msk [vmem:[#allocation0] sm:$0x1] %vm63, %v62
    %s65 = scalar_lea.vmem %s0, 5
    %v66 = vld [vmem:[%s65] sm:$0x1]
    %67 = vrot.lane.b32.xlu0 %v66, 40
    %v68 = vpop.permute.xlu0 %67
    %vm69 = vcmask 392512
    %70 = vst.msk [vmem:[#allocation0] sm:$0x1] %vm69, %v68
    %s71 = scalar_lea.vmem %s0, 4
    %v72 = vld [vmem:[%s71] sm:$0x1]
    %73 = vrot.lane.b32.xlu0 %v72, 32
    %v74 = vpop.permute.xlu0 %73
    %vm75 = vcmask 326912
    %76 = vst.msk [vmem:[#allocation0] sm:$0x1] %vm75, %v74
    %s77 = scalar_lea.vmem %s0, 3
    %v78 = vld [vmem:[%s77] sm:$0x1]
    %79 = vrot.lane.b32.xlu0 %v78, 24
    %v80 = vpop.permute.xlu0 %79
    %vm81 = vcmask 261312
    %82 = vst.msk [vmem:[#allocation0] sm:$0x1] %vm81, %v80
    %s83 = scalar_lea.vmem %s0, 2
    %v84 = vld [vmem:[%s83] sm:$0x1]
    %85 = vrot.lane.b32.xlu0 %v84, 16
    %v86 = vpop.permute.xlu0 %85
    %vm87 = vcmask 195712
    %88 = vst.msk [vmem:[#allocation0] sm:$0x1] %vm87, %v86
    %s89 = scalar_lea.vmem %s0, 1
    %v90 = vld [vmem:[%s89] sm:$0x1]
    %91 = vrot.lane.b32.xlu0 %v90, 8
    %v92 = vpop.permute.xlu0 %91
    %vm93 = vcmask 130112
    %94 = vst.msk [vmem:[#allocation0] sm:$0x1] %vm93, %v92
    %s96 = ssub.s32 2, 1
    %v97 = vld [vmem:[#allocation0] sm:%s96]
    %s99 = ssub.s32 2, 1
    %100 = vst [vmem:[%s1] sm:%s99] %v97

// kernel: basic_block_forward.1
$region0: #{basic_block_forward.1}
  #allocation0 [shape = 'u32[]', space=smem, size = 0x4, offset = 0x4, fixed_abs, tag = 'smem constant byte address 0x4 - core index']
  #allocation1 [shape = 'u32[72,128]{1,0:T(1,128)}', space=vmem, size = 0x9000, scoped, tag = 'internal scratch']
  #allocation2 [shape = 'f32[18,128]{1,0:T(8,128)}', space=vmem, size = 0x3000, scoped, tag = 'scratch operand']
  #allocation3 [shape = 'f32[18,128]{1,0:T(8,128)}', space=vmem, size = 0x3000, scoped, tag = 'scratch operand']
  %s0 = inlined_call_operand.vmem [shape: f32[2,16,128], index: 0, kind: input, shape index: {}]
  %s1 = inlined_call_operand.vmem [shape: f32[3,128,128], index: 1, kind: input, shape index: {}]
  %s2 = inlined_call_operand.vmem [shape: f32[1,128], index: 2, kind: input, shape index: {}]
  %s3 = inlined_call_operand.vmem [shape: f32[3,128,128], index: 3, kind: input, shape index: {}]
  %s4 = inlined_call_operand.vmem [shape: f32[1,128], index: 4, kind: input, shape index: {}]
  %s5 = inlined_call_operand.vmem [shape: f32[2,16,128], index: 5, kind: output, shape index: {}]
  %s6 = sld [smem:[#allocation0]]
  $region53: #{basic_block_forward.1} parent=0
    _
  %s8 = ssub.s32 1, %s6
  %s9 = scalar_select 0, %s8, %s6
  loop: start=0, step=1, limit=4
  $region2: #{basic_block_forward.1} parent=0 // loop_pre_header
    _
  $region3: #{basic_block_forward.1} parent=0 // loop_header
    %s11 = sphi 0, %s15
    %p12 = scmp.ge.s32.totalorder %s11, 4
    %s21 = sphi 0, %s23
    %s24 = sphi 0, %s21
    %s25 = sphi 0, %s24
    %s41 = sphi 0, %s25
    %s45 = sphi 0, %s45
    %s47 = sphi 0, %s45
    %s48 = sphi 0, %s47
    %s62 = sphi 0, %s48
    %s66 = sphi 0, %s66
    %s68 = sphi 0, %s66
    %s69 = sphi 0, %s68
    %s83 = sphi 0, %s69
    %s87 = sphi 0, %s87
    %s89 = sphi 0, %s87
    %s90 = sphi 0, %s89
    %s104 = sphi 0, %s90
    %s108 = sphi 0, %s108
    %s110 = sphi 0, %s108
    %s111 = sphi 0, %s110
    %s125 = sphi 0, %s111
    %s131 = sphi 0, %s133
    %s134 = sphi 0, %s131
    %s135 = sphi 0, %s134
    %s151 = sphi 0, %s135
  $region4: #{basic_block_forward.1} parent=0 // loop_header_branch
    %14 = sbr.rel (%p12) target = $region8
  $region5: #{basic_block_forward.1} parent=0 // loop_body
    %s16 = ssub.s32 %s11, 1
    %s17 = ssub.s32 %s11, 2
    %s18 = sadd.s32 %s11, 1
    %s19 = ssub.s32 %s11, %s18
    %p20 = scmp.eq.s32.totalorder %s19, 0
    %s22 = sadd.s32 %s21, 1
    %s23 = scalar_select %p20, %s21, %s22
    %p26 = pneg %p20
    %p27 = scmp.eq.s32.totalorder %s11, 1
    %p28 = por %p26, %p27
    %p29 = scmp.ne.s32.totalorder %s21, %s24
    %p30 = scmp.eq.s32.totalorder %s11, 0
    %p31 = por %p29, %p30
    %p32 = scmp.ne.s32.totalorder %s21, %s24
    %p33 = scmp.eq.s32.totalorder %s16, 1
    %p34 = por %p32, %p33
    %p35 = scmp.ne.s32.totalorder %s24, %s25
    %p36 = scmp.eq.s32.totalorder %s16, 0
    %p37 = por %p35, %p36
    %p38 = scmp.ne.s32.totalorder %s24, %s25
    %p39 = scmp.eq.s32.totalorder %s17, 1
    %p40 = por %p38, %p39
    %p42 = scmp.ne.s32.totalorder %s25, %s41
    %p43 = scmp.eq.s32.totalorder %s17, 0
    %p44 = por %p42, %p43
    %s46 = sadd.s32 %s45, 1
    %p49 = scmp.eq.s32.totalorder %s11, 1
    %p50 = scmp.ne.s32.totalorder %s45, %s47
    %p51 = scmp.eq.s32.totalorder %s11, 0
    %p52 = por %p50, %p51
    %p53 = scmp.ne.s32.totalorder %s45, %s47
    %p54 = scmp.eq.s32.totalorder %s16, 1
    %p55 = por %p53, %p54
    %p56 = scmp.ne.s32.totalorder %s47, %s48
    %p57 = scmp.eq.s32.totalorder %s16, 0
    %p58 = por %p56, %p57
    %p59 = scmp.ne.s32.totalorder %s47, %s48
    %p60 = scmp.eq.s32.totalorder %s17, 1
    %p61 = por %p59, %p60
    %p63 = scmp.ne.s32.totalorder %s48, %s62
    %p64 = scmp.eq.s32.totalorder %s17, 0
    %p65 = por %p63, %p64
    %s67 = sadd.s32 %s66, 1
    %p70 = scmp.eq.s32.totalorder %s11, 1
    %p71 = scmp.ne.s32.totalorder %s66, %s68
    %p72 = scmp.eq.s32.totalorder %s11, 0
    %p73 = por %p71, %p72
    %p74 = scmp.ne.s32.totalorder %s66, %s68
    %p75 = scmp.eq.s32.totalorder %s16, 1
    %p76 = por %p74, %p75
    %p77 = scmp.ne.s32.totalorder %s68, %s69
    %p78 = scmp.eq.s32.totalorder %s16, 0
    %p79 = por %p77, %p78
    %p80 = scmp.ne.s32.totalorder %s68, %s69
    %p81 = scmp.eq.s32.totalorder %s17, 1
    %p82 = por %p80, %p81
    %p84 = scmp.ne.s32.totalorder %s69, %s83
    %p85 = scmp.eq.s32.totalorder %s17, 0
    %p86 = por %p84, %p85
    %s88 = sadd.s32 %s87, 1
    %p91 = scmp.eq.s32.totalorder %s11, 1
    %p92 = scmp.ne.s32.totalorder %s87, %s89
    %p93 = scmp.eq.s32.totalorder %s11, 0
    %p94 = por %p92, %p93
    %p95 = scmp.ne.s32.totalorder %s87, %s89
    %p96 = scmp.eq.s32.totalorder %s16, 1
    %p97 = por %p95, %p96
    %p98 = scmp.ne.s32.totalorder %s89, %s90
    %p99 = scmp.eq.s32.totalorder %s16, 0
    %p100 = por %p98, %p99
    %p101 = scmp.ne.s32.totalorder %s89, %s90
    %p102 = scmp.eq.s32.totalorder %s17, 1
    %p103 = por %p101, %p102
    %p105 = scmp.ne.s32.totalorder %s90, %s104
    %p106 = scmp.eq.s32.totalorder %s17, 0
    %p107 = por %p105, %p106
    %s109 = sadd.s32 %s108, 1
    %p112 = scmp.eq.s32.totalorder %s11, 1
    %p113 = scmp.ne.s32.totalorder %s108, %s110
    %p114 = scmp.eq.s32.totalorder %s11, 0
    %p115 = por %p113, %p114
    %p116 = scmp.ne.s32.totalorder %s108, %s110
    %p117 = scmp.eq.s32.totalorder %s16, 1
    %p118 = por %p116, %p117
    %p119 = scmp.ne.s32.totalorder %s110, %s111
    %p120 = scmp.eq.s32.totalorder %s16, 0
    %p121 = por %p119, %p120
    %p122 = scmp.ne.s32.totalorder %s110, %s111
    %p123 = scmp.eq.s32.totalorder %s17, 1
    %p124 = por %p122, %p123
    %p126 = scmp.ne.s32.totalorder %s111, %s125
    %p127 = scmp.eq.s32.totalorder %s17, 0
    %p128 = por %p126, %p127
    %s129 = ssub.s32 %s11, %s18
    %p130 = scmp.eq.s32.totalorder %s129, 0
    %s132 = sadd.s32 %s131, 1
    %s133 = scalar_select %p130, %s131, %s132
    %p136 = pneg %p130
    %p137 = scmp.eq.s32.totalorder %s11, 1
    %p138 = por %p136, %p137
    %p139 = scmp.ne.s32.totalorder %s131, %s134
    %p140 = scmp.eq.s32.totalorder %s11, 0
    %p141 = por %p139, %p140
    %p142 = scmp.ne.s32.totalorder %s131, %s134
    %p143 = scmp.eq.s32.totalorder %s16, 1
    %p144 = por %p142, %p143
    %p145 = scmp.ne.s32.totalorder %s134, %s135
    %p146 = scmp.eq.s32.totalorder %s16, 0
    %p147 = por %p145, %p146
    %p148 = scmp.ne.s32.totalorder %s134, %s135
    %p149 = scmp.eq.s32.totalorder %s17, 1
    %p150 = por %p148, %p149
    %p152 = scmp.ne.s32.totalorder %s135, %s151
    %p153 = scmp.eq.s32.totalorder %s17, 0
    %p154 = por %p152, %p153
    %p155 = scmp.le.s32.totalorder 1, %s11
    %p156 = scmp.lt.s32.totalorder %s11, 3
    %p157 = pnand %p155, %p156
    %p158 = pneg %p157
    // Predicated region
    $region9: #{basic_block_forward.1} parent=5 // pred_check
      _
    $region10: #{basic_block_forward.1} parent=5 // pred_check_branch
      %160 = sbr.rel (%p157) target = $region12
    $region11: #{basic_block_forward.1} parent=5 // pred_region
      %s161 = ssub.s32 %s11, 1
      // Predicated region
      $region13: #{basic_block_forward.1} parent=11 // pred_check
        %p162 = pneg %p58
      $region14: #{basic_block_forward.1} parent=11 // pred_check_branch
        %164 = sbr.rel (%p162) target = $region16
      $region15: #{basic_block_forward.1} parent=11 // pred_region
        _
      $region16: #{basic_block_forward.1} parent=11 // pred_fallthru
        _
      // Predicated region
      $region17: #{basic_block_forward.1} parent=11 // pred_check
        %p165 = pneg %p79
      $region18: #{basic_block_forward.1} parent=11 // pred_check_branch
        %167 = sbr.rel (%p165) target = $region20
      $region19: #{basic_block_forward.1} parent=11 // pred_region
        _
      $region20: #{basic_block_forward.1} parent=11 // pred_fallthru
        _
      // Predicated region
      $region21: #{basic_block_forward.1} parent=11 // pred_check
        %p168 = pneg %p100
      $region22: #{basic_block_forward.1} parent=11 // pred_check_branch
        %170 = sbr.rel (%p168) target = $region24
      $region23: #{basic_block_forward.1} parent=11 // pred_region
        _
      $region24: #{basic_block_forward.1} parent=11 // pred_fallthru
        _
      // Predicated region
      $region25: #{basic_block_forward.1} parent=11 // pred_check
        %p171 = pneg %p121
      $region26: #{basic_block_forward.1} parent=11 // pred_check_branch
        %173 = sbr.rel (%p171) target = $region28
      $region27: #{basic_block_forward.1} parent=11 // pred_region
        _
      $region28: #{basic_block_forward.1} parent=11 // pred_fallthru
        _
    $region12: #{basic_block_forward.1} parent=5 // pred_fallthru
      _
    %p174 = scmp.lt.s32.totalorder %s11, 2
    // Predicated region
    $region29: #{basic_block_forward.1} parent=5 // pred_check
      %p175 = pneg %p174
    $region30: #{basic_block_forward.1} parent=5 // pred_check_branch
      %177 = sbr.rel (%p175) target = $region32
    $region31: #{basic_block_forward.1} parent=5 // pred_region
      // Predicated region
      $region33: #{basic_block_forward.1} parent=31 // pred_check
        %p178 = pneg %p31
      $region34: #{basic_block_forward.1} parent=31 // pred_check_branch
        %180 = sbr.rel (%p178) target = $region36
      $region35: #{basic_block_forward.1} parent=31 // pred_region
        %p181 = scmp.lt.s32.totalorder %s11, 1
        %s182 = scalar_select %p181, %s11, 1
        %s183 = smul.addr %s182, 2
        %s184 = smul.addr %s183, 8
        %s185 = scalar_lea.vmem %s0, %s184
      $region36: #{basic_block_forward.1} parent=31 // pred_fallthru
        _
    $region32: #{basic_block_forward.1} parent=5 // pred_fallthru
      _
    %p186 = scmp.le.s32.totalorder 1, %s11
    %p187 = scmp.lt.s32.totalorder %s11, 3
    %p188 = pnand %p186, %p187
    %p189 = pneg %p188
    // Predicated region
    $region37: #{basic_block_forward.1} parent=5 // pred_check
      _
    $region38: #{basic_block_forward.1} parent=5 // pred_check_branch
      %191 = sbr.rel (%p188) target = $region40
    $region39: #{basic_block_forward.1} parent=5 // pred_region
      %s192 = ssub.s32 %s11, 1
      %p193 = scmp.lt.s32.totalorder %s16, 1
      %s194 = scalar_select %p193, %s16, 1
      %s195 = smul.addr %s194, 2
      %s196 = smul.addr %s195, 8
      %s197 = scalar_lea.vmem %s0, %s196
      %p198 = pneg %p37
      %p199 = pneg %p34
      %p200 = pneg %p58
      %p201 = pneg %p55
      %p202 = pneg %p79
      %p203 = pneg %p76
      %p204 = pneg %p100
      %p205 = pneg %p97
      %p206 = pneg %p121
      %p207 = pneg %p118
      %p208 = pneg %p147
      %p209 = pneg %p144
      %p210 = scmp.lt.s32.totalorder %s16, 1
      %s211 = scalar_select %p210, %s16, 1
      %s212 = smul.addr %s211, 2
      %s213 = smul.addr %s212, 8
      %s214 = scalar_lea.vmem %s5, %s213
      %p215 = scmp.lt.s32.totalorder %s16, 1
      %s216 = scalar_select %p215, %s16, 1
      %s217 = smul.addr %s216, 2
      %s218 = smul.addr %s217, 8
      %s219 = scalar_lea.vmem %s0, %s218
      %p220 = scmp.lt.s32.totalorder %s16, 1
      %s221 = scalar_select %p220, %s16, 1
      %s222 = smul.addr %s221, 2
      %s223 = smul.addr %s222, 8
      %s224 = scalar_lea.vmem %s5, %s223
      %v225 = vld [vmem:[%s219] sm:$0xff]
      %v226 = vld [vmem:[%s219 + $0x8] sm:$0xff]
      %227 = vst [vmem:[#allocation2] sm:$0xff] 0.0
      %228 = vst [vmem:[#allocation2 + $0x8] sm:$0xff] 0.0
      %229 = vst [vmem:[#allocation2 + $0x10] sm:$0x3] 0.0
      %230 = vst [vmem:[#allocation2 + $0x1] sm:$0xff] %v225
      %231 = vst [vmem:[#allocation2 + $0x9] sm:$0xff] %v226
      %v232 = vld [vmem:[#allocation2] sm:$0xff]
      %v233 = vld [vmem:[#allocation2 + $0x8] sm:$0xff]
      %v234 = vld [vmem:[%s1] sm:$0xff]
      %v235 = vld [vmem:[%s1 + $0x8] sm:$0xff]
      %v236 = vld [vmem:[%s1 + $0x10] sm:$0xff]
      %v237 = vld [vmem:[%s1 + $0x18] sm:$0xff]
      %v238 = vld [vmem:[%s1 + $0x20] sm:$0xff]
      %v239 = vld [vmem:[%s1 + $0x28] sm:$0xff]
      %v240 = vld [vmem:[%s1 + $0x30] sm:$0xff]
      %v241 = vld [vmem:[%s1 + $0x38] sm:$0xff]
      %v242 = vld [vmem:[%s1 + $0x40] sm:$0xff]
      %v243 = vld [vmem:[%s1 + $0x48] sm:$0xff]
      %v244 = vld [vmem:[%s1 + $0x50] sm:$0xff]
      %v245 = vld [vmem:[%s1 + $0x58] sm:$0xff]
      %v246 = vld [vmem:[%s1 + $0x60] sm:$0xff]
      %v247 = vld [vmem:[%s1 + $0x68] sm:$0xff]
      %v248 = vld [vmem:[%s1 + $0x70] sm:$0xff]
      %v249 = vld [vmem:[%s1 + $0x78] sm:$0xff]
      %s250 = scalar_lea.vmem %s1, 128
      %v251 = vld [vmem:[%s250] sm:$0xff]
      %v252 = vld [vmem:[%s250 + $0x8] sm:$0xff]
      %v253 = vld [vmem:[%s250 + $0x10] sm:$0xff]
      %v254 = vld [vmem:[%s250 + $0x18] sm:$0xff]
      %v255 = vld [vmem:[%s250 + $0x20] sm:$0xff]
      %v256 = vld [vmem:[%s250 + $0x28] sm:$0xff]
      %v257 = vld [vmem:[%s250 + $0x30] sm:$0xff]
      %v258 = vld [vmem:[%s250 + $0x38] sm:$0xff]
      %v259 = vld [vmem:[%s250 + $0x40] sm:$0xff]
      %v260 = vld [vmem:[%s250 + $0x48] sm:$0xff]
      %v261 = vld [vmem:[%s250 + $0x50] sm:$0xff]
      %v262 = vld [vmem:[%s250 + $0x58] sm:$0xff]
      %v263 = vld [vmem:[%s250 + $0x60] sm:$0xff]
      %v264 = vld [vmem:[%s250 + $0x68] sm:$0xff]
      %v265 = vld [vmem:[%s250 + $0x70] sm:$0xff]
      %v266 = vld [vmem:[%s250 + $0x78] sm:$0xff]
      %267 = vmatpush.msra.mxu0 %v266
      %268 = vmatpush.msra.mxu0 %v265
      %269 = vmatpush.msra.mxu0 %v264
      %270 = vmatpush.msra.mxu0 %v263
      %271 = vmatpush.msra.mxu0 %v262
      %272 = vmatpush.msra.mxu0 %v261
      %273 = vmatpush.msra.mxu0 %v260
      %274 = vmatpush.msra.mxu0 %v259
      %275 = vmatpush.msra.mxu0 %v258
      %276 = vmatpush.msra.mxu0 %v257
      %277 = vmatpush.msra.mxu0 %v256
      %278 = vmatpush.msra.mxu0 %v255
      %279 = vmatpush.msra.mxu0 %v254
      %280 = vmatpush.msra.mxu0 %v253
      %281 = vmatpush.msra.mxu0 %v252
      %282 = vmatpush.msra.mxu0 %v251
      %283 = vmatmul.f32.gmra.mxu0 %v225
      %v284 = vpop.f32.mrf.mxu0
      %v285 = vadd.f32 0.0, %v284
      %286 = vmatmul.f32.gmra.mxu0 %v226
      %v287 = vpop.f32.mrf.mxu0
      %v288 = vadd.f32 0.0, %v287
      %289 = vdwg.mxu0
      %290 = vmatpush.msra.mxu0 %v249
      %291 = vmatpush.msra.mxu0 %v248
      %292 = vmatpush.msra.mxu0 %v247
      %293 = vmatpush.msra.mxu0 %v246
      %294 = vmatpush.msra.mxu0 %v245
      %295 = vmatpush.msra.mxu0 %v244
      %296 = vmatpush.msra.mxu0 %v243
      %297 = vmatpush.msra.mxu0 %v242
      %298 = vmatpush.msra.mxu0 %v241
      %299 = vmatpush.msra.mxu0 %v240
      %300 = vmatpush.msra.mxu0 %v239
      %301 = vmatpush.msra.mxu0 %v238
      %302 = vmatpush.msra.mxu0 %v237
      %303 = vmatpush.msra.mxu0 %v236
      %304 = vmatpush.msra.mxu0 %v235
      %305 = vmatpush.msra.mxu0 %v234
      %306 = vmatmul.f32.gmra.mxu0 %v232
      %v307 = vpop.f32.mrf.mxu0
      %v308 = vadd.f32 %v285, %v307
      %309 = vmatmul.f32.gmra.mxu0 %v233
      %v310 = vpop.f32.mrf.mxu0
      %v311 = vadd.f32 %v288, %v310
      %312 = vdwg.mxu0
      %v313 = vld [vmem:[#allocation2 + $0x2] sm:$0xff]
      %v314 = vld [vmem:[#allocation2 + $0xa] sm:$0xff]
      %s315 = scalar_lea.vmem %s1, 256
      %v316 = vld [vmem:[%s315] sm:$0xff]
      %v317 = vld [vmem:[%s315 + $0x8] sm:$0xff]
      %v318 = vld [vmem:[%s315 + $0x10] sm:$0xff]
      %v319 = vld [vmem:[%s315 + $0x18] sm:$0xff]
      %v320 = vld [vmem:[%s315 + $0x20] sm:$0xff]
      %v321 = vld [vmem:[%s315 + $0x28] sm:$0xff]
      %v322 = vld [vmem:[%s315 + $0x30] sm:$0xff]
      %v323 = vld [vmem:[%s315 + $0x38] sm:$0xff]
      %v324 = vld [vmem:[%s315 + $0x40] sm:$0xff]
      %v325 = vld [vmem:[%s315 + $0x48] sm:$0xff]
      %v326 = vld [vmem:[%s315 + $0x50] sm:$0xff]
      %v327 = vld [vmem:[%s315 + $0x58] sm:$0xff]
      %v328 = vld [vmem:[%s315 + $0x60] sm:$0xff]
      %v329 = vld [vmem:[%s315 + $0x68] sm:$0xff]
      %v330 = vld [vmem:[%s315 + $0x70] sm:$0xff]
      %v331 = vld [vmem:[%s315 + $0x78] sm:$0xff]
      %332 = vmatpush.msra.mxu0 %v331
      %333 = vmatpush.msra.mxu0 %v330
      %334 = vmatpush.msra.mxu0 %v329
      %335 = vmatpush.msra.mxu0 %v328
      %336 = vmatpush.msra.mxu0 %v327
      %337 = vmatpush.msra.mxu0 %v326
      %338 = vmatpush.msra.mxu0 %v325
      %339 = vmatpush.msra.mxu0 %v324
      %340 = vmatpush.msra.mxu0 %v323
      %341 = vmatpush.msra.mxu0 %v322
      %342 = vmatpush.msra.mxu0 %v321
      %343 = vmatpush.msra.mxu0 %v320
      %344 = vmatpush.msra.mxu0 %v319
      %345 = vmatpush.msra.mxu0 %v318
      %346 = vmatpush.msra.mxu0 %v317
      %347 = vmatpush.msra.mxu0 %v316
      %348 = vmatmul.f32.gmra.mxu0 %v313
      %v349 = vpop.f32.mrf.mxu0
      %v350 = vadd.f32 0.0, %v349
      %351 = vmatmul.f32.gmra.mxu0 %v314
      %v352 = vpop.f32.mrf.mxu0
      %v353 = vadd.f32 0.0, %v352
      %354 = vdwg.mxu0
      %v355 = vadd.f32 %v308, %v350
      %v356 = vadd.f32 %v311, %v353
      %v357 = vld [vmem:[%s2] sm:$0x1]
      %v359 = vperm.slane %v357, 0
      %v361 = vadd.f32 %v355, %v359
      %v362 = vadd.f32 %v356, %v359
      %v363 = vmax.f32 %v361, 0.0
      %v364 = vmax.f32 %v362, 0.0
      %365 = vst [vmem:[#allocation3] sm:$0xff] 0.0
      %366 = vst [vmem:[#allocation3 + $0x8] sm:$0xff] 0.0
      %367 = vst [vmem:[#allocation3 + $0x10] sm:$0x3] 0.0
      %368 = vst [vmem:[#allocation3 + $0x1] sm:$0xff] %v363
      %369 = vst [vmem:[#allocation3 + $0x9] sm:$0xff] %v364
      %v370 = vld [vmem:[#allocation3] sm:$0xff]
      %v371 = vld [vmem:[#allocation3 + $0x8] sm:$0xff]
      %v372 = vld [vmem:[%s3] sm:$0xff]
      %v373 = vld [vmem:[%s3 + $0x8] sm:$0xff]
      %v374 = vld [vmem:[%s3 + $0x10] sm:$0xff]
      %v375 = vld [vmem:[%s3 + $0x18] sm:$0xff]
      %v376 = vld [vmem:[%s3 + $0x20] sm:$0xff]
      %v377 = vld [vmem:[%s3 + $0x28] sm:$0xff]
      %v378 = vld [vmem:[%s3 + $0x30] sm:$0xff]
      %v379 = vld [vmem:[%s3 + $0x38] sm:$0xff]
      %v380 = vld [vmem:[%s3 + $0x40] sm:$0xff]
      %v381 = vld [vmem:[%s3 + $0x48] sm:$0xff]
      %v382 = vld [vmem:[%s3 + $0x50] sm:$0xff]
      %v383 = vld [vmem:[%s3 + $0x58] sm:$0xff]
      %v384 = vld [vmem:[%s3 + $0x60] sm:$0xff]
      %v385 = vld [vmem:[%s3 + $0x68] sm:$0xff]
      %v386 = vld [vmem:[%s3 + $0x70] sm:$0xff]
      %v387 = vld [vmem:[%s3 + $0x78] sm:$0xff]
      %s388 = scalar_lea.vmem %s3, 128
      %v389 = vld [vmem:[%s388] sm:$0xff]
      %v390 = vld [vmem:[%s388 + $0x8] sm:$0xff]
      %v391 = vld [vmem:[%s388 + $0x10] sm:$0xff]
      %v392 = vld [vmem:[%s388 + $0x18] sm:$0xff]
      %v393 = vld [vmem:[%s388 + $0x20] sm:$0xff]
      %v394 = vld [vmem:[%s388 + $0x28] sm:$0xff]
      %v395 = vld [vmem:[%s388 + $0x30] sm:$0xff]
      %v396 = vld [vmem:[%s388 + $0x38] sm:$0xff]
      %v397 = vld [vmem:[%s388 + $0x40] sm:$0xff]
      %v398 = vld [vmem:[%s388 + $0x48] sm:$0xff]
      %v399 = vld [vmem:[%s388 + $0x50] sm:$0xff]
      %v400 = vld [vmem:[%s388 + $0x58] sm:$0xff]
      %v401 = vld [vmem:[%s388 + $0x60] sm:$0xff]
      %v402 = vld [vmem:[%s388 + $0x68] sm:$0xff]
      %v403 = vld [vmem:[%s388 + $0x70] sm:$0xff]
      %v404 = vld [vmem:[%s388 + $0x78] sm:$0xff]
      %405 = vmatpush.msra.mxu0 %v404
      %406 = vmatpush.msra.mxu0 %v403
      %407 = vmatpush.msra.mxu0 %v402
      %408 = vmatpush.msra.mxu0 %v401
      %409 = vmatpush.msra.mxu0 %v400
      %410 = vmatpush.msra.mxu0 %v399
      %411 = vmatpush.msra.mxu0 %v398
      %412 = vmatpush.msra.mxu0 %v397
      %413 = vmatpush.msra.mxu0 %v396
      %414 = vmatpush.msra.mxu0 %v395
      %415 = vmatpush.msra.mxu0 %v394
      %416 = vmatpush.msra.mxu0 %v393
      %417 = vmatpush.msra.mxu0 %v392
      %418 = vmatpush.msra.mxu0 %v391
      %419 = vmatpush.msra.mxu0 %v390
      %420 = vmatpush.msra.mxu0 %v389
      %421 = vmatmul.f32.gmra.mxu0 %v363
      %v422 = vpop.f32.mrf.mxu0
      %v423 = vadd.f32 0.0, %v422
      %424 = vmatmul.f32.gmra.mxu0 %v364
      %v425 = vpop.f32.mrf.mxu0
      %v426 = vadd.f32 0.0, %v425
      %427 = vdwg.mxu0
      %428 = vmatpush.msra.mxu0 %v387
      %429 = vmatpush.msra.mxu0 %v386
      %430 = vmatpush.msra.mxu0 %v385
      %431 = vmatpush.msra.mxu0 %v384
      %432 = vmatpush.msra.mxu0 %v383
      %433 = vmatpush.msra.mxu0 %v382
      %434 = vmatpush.msra.mxu0 %v381
      %435 = vmatpush.msra.mxu0 %v380
      %436 = vmatpush.msra.mxu0 %v379
      %437 = vmatpush.msra.mxu0 %v378
      %438 = vmatpush.msra.mxu0 %v377
      %439 = vmatpush.msra.mxu0 %v376
      %440 = vmatpush.msra.mxu0 %v375
      %441 = vmatpush.msra.mxu0 %v374
      %442 = vmatpush.msra.mxu0 %v373
      %443 = vmatpush.msra.mxu0 %v372
      %444 = vmatmul.f32.gmra.mxu0 %v370
      %v445 = vpop.f32.mrf.mxu0
      %v446 = vadd.f32 %v423, %v445
      %447 = vmatmul.f32.gmra.mxu0 %v371
      %v448 = vpop.f32.mrf.mxu0
      %v449 = vadd.f32 %v426, %v448
      %450 = vdwg.mxu0
      %v451 = vld [vmem:[#allocation3 + $0x2] sm:$0xff]
      %v452 = vld [vmem:[#allocation3 + $0xa] sm:$0xff]
      %s453 = scalar_lea.vmem %s3, 256
      %v454 = vld [vmem:[%s453] sm:$0xff]
      %v455 = vld [vmem:[%s453 + $0x8] sm:$0xff]
      %v456 = vld [vmem:[%s453 + $0x10] sm:$0xff]
      %v457 = vld [vmem:[%s453 + $0x18] sm:$0xff]
      %v458 = vld [vmem:[%s453 + $0x20] sm:$0xff]
      %v459 = vld [vmem:[%s453 + $0x28] sm:$0xff]
      %v460 = vld [vmem:[%s453 + $0x30] sm:$0xff]
      %v461 = vld [vmem:[%s453 + $0x38] sm:$0xff]
      %v462 = vld [vmem:[%s453 + $0x40] sm:$0xff]
      %v463 = vld [vmem:[%s453 + $0x48] sm:$0xff]
      %v464 = vld [vmem:[%s453 + $0x50] sm:$0xff]
      %v465 = vld [vmem:[%s453 + $0x58] sm:$0xff]
      %v466 = vld [vmem:[%s453 + $0x60] sm:$0xff]
      %v467 = vld [vmem:[%s453 + $0x68] sm:$0xff]
      %v468 = vld [vmem:[%s453 + $0x70] sm:$0xff]
      %v469 = vld [vmem:[%s453 + $0x78] sm:$0xff]
      %470 = vmatpush.msra.mxu0 %v469
      %471 = vmatpush.msra.mxu0 %v468
      %472 = vmatpush.msra.mxu0 %v467
      %473 = vmatpush.msra.mxu0 %v466
      %474 = vmatpush.msra.mxu0 %v465
      %475 = vmatpush.msra.mxu0 %v464
      %476 = vmatpush.msra.mxu0 %v463
      %477 = vmatpush.msra.mxu0 %v462
      %478 = vmatpush.msra.mxu0 %v461
      %479 = vmatpush.msra.mxu0 %v460
      %480 = vmatpush.msra.mxu0 %v459
      %481 = vmatpush.msra.mxu0 %v458
      %482 = vmatpush.msra.mxu0 %v457
      %483 = vmatpush.msra.mxu0 %v456
      %484 = vmatpush.msra.mxu0 %v455
      %485 = vmatpush.msra.mxu0 %v454
      %486 = vmatmul.f32.gmra.mxu0 %v451
      %v487 = vpop.f32.mrf.mxu0
      %v488 = vadd.f32 0.0, %v487
      %489 = vmatmul.f32.gmra.mxu0 %v452
      %v490 = vpop.f32.mrf.mxu0
      %v491 = vadd.f32 0.0, %v490
      %492 = vdwg.mxu0
      %v493 = vadd.f32 %v446, %v488
      %v494 = vadd.f32 %v449, %v491
      %v495 = vld [vmem:[%s4] sm:$0x1]
      %v497 = vperm.slane %v495, 0
      %v499 = vadd.f32 %v493, %v497
      %v500 = vadd.f32 %v494, %v497
      %v501 = vadd.f32 %v499, %v225
      %v502 = vadd.f32 %v500, %v226
      %v503 = vmax.f32 %v501, 0.0
      %v504 = vmax.f32 %v502, 0.0
      %505 = vst [vmem:[%s224] sm:$0xff] %v503
      %506 = vst [vmem:[%s224 + $0x8] sm:$0xff] %v504
      %p507 = scmp.lt.s32.totalorder %s16, 1
      %s508 = scalar_select %p507, %s16, 1
      %s509 = smul.addr %s508, 2
      %s510 = smul.addr %s509, 8
      %s511 = scalar_lea.vmem %s5, %s510
      // Predicated region
      $region41: #{basic_block_forward.1} parent=39 // pred_check
        %p512 = pneg %p144
      $region42: #{basic_block_forward.1} parent=39 // pred_check_branch
        %514 = sbr.rel (%p512) target = $region44
      $region43: #{basic_block_forward.1} parent=39 // pred_region
        _
      $region44: #{basic_block_forward.1} parent=39 // pred_fallthru
        _
    $region40: #{basic_block_forward.1} parent=5 // pred_fallthru
      _
    %p515 = scmp.le.s32.totalorder 2, %s11
    // Predicated region
    $region45: #{basic_block_forward.1} parent=5 // pred_check
      %p516 = pneg %p515
    $region46: #{basic_block_forward.1} parent=5 // pred_check_branch
      %518 = sbr.rel (%p516) target = $region48
    $region47: #{basic_block_forward.1} parent=5 // pred_region
      %s519 = ssub.s32 %s11, 2
      // Predicated region
      $region49: #{basic_block_forward.1} parent=47 // pred_check
        %p520 = pneg %p150
      $region50: #{basic_block_forward.1} parent=47 // pred_check_branch
        %522 = sbr.rel (%p520) target = $region52
      $region51: #{basic_block_forward.1} parent=47 // pred_region
        %p523 = scmp.lt.s32.totalorder %s17, 1
        %s524 = scalar_select %p523, %s17, 1
        %s525 = smul.addr %s524, 2
        %s526 = smul.addr %s525, 8
        %s527 = scalar_lea.vmem %s5, %s526
      $region52: #{basic_block_forward.1} parent=47 // pred_fallthru
        _
    $region48: #{basic_block_forward.1} parent=5 // pred_fallthru
      _
  $region6: #{basic_block_forward.1} parent=0 // loop_footer
    %s15 = sadd.s32 1, %s11
  $region7: #{basic_block_forward.1} parent=0 // loop_footer_branch
    %10 = sbr.rel target = $region3
  $region8: #{basic_block_forward.1} parent=0 // loop_exit
    _

</llo_original>
